<compile_context>
chip_gen: v7x
topology: tpu7x:2x2x1
jax: 0.10.0
libtpu: 0.0.40
codegen_flags: <defaults>
</compile_context>

<pallas_src>
import functools

import jax
import jax.numpy as jnp
from jax import lax
from jax.experimental import pallas as pl
from jax.experimental.pallas import tpu as pltpu


def _round_up(x, m):
    return ((x + m - 1) // m) * m


def _sublane_multiple(itemsize):
    # f32 -> 8, bf16 -> 16, int8/fp8 -> 32 (sublane packing of the 2nd-minor dim)
    return {4: 8, 2: 16, 1: 32}.get(itemsize, 8)


def _vmem_capacity_bytes():
    try:
        return int(pltpu.get_tpu_info().vmem_capacity_bytes)
    except Exception:
        return 64 << 20  # conservative (v7x) fallback


def _choose_lb(HW, C_in, C_out, itemsize, budget_bytes):
    """Pick the flat-axis tile Lb so one (in + out) block stays under
    `budget_bytes` (double-buffered footprint ~2x).  Lb is a multiple of 128
    lanes, or the full H*W when that already fits."""
    sub = _sublane_multiple(itemsize)
    bytes_per_col = (_round_up(C_in, sub) + _round_up(C_out, sub)) * itemsize
    max_lb = max(budget_bytes // bytes_per_col, 128)
    if HW <= max_lb:
        return HW                       # single block along H*W (full dim is legal)
    return (max_lb // 128) * 128        # lane-aligned; remainder handled by cdiv grid


def addcoords_kernel(x_ref, o_ref, *, C, H, W, Lb, with_r, l_axis):
    # x_ref: (1, C, Lb) block of x viewed as (N, C, H*W)
    # o_ref: (1, C + 2(+1), Lb) block of the output, same flat window.

    # 1) Pass-through copy of the input channels (lane-dense tile store).
    o_ref[:, :C, :] = x_ref[...]

    # 2) Coordinate channels, generated in-register from the global flat index.
    start = pl.program_id(l_axis) * Lb
    flat = lax.broadcasted_iota(jnp.int32, (1, Lb), 1) + start   # global H*W index

    # Division-free exact divmod:  row = flat // W, col = flat % W.
    # The f32 estimate is within +-3 of the true quotient for flat < 2**23
    # (asserted in the wrapper); the integer fix-up below makes it exact.
    # TODO(synk): switch to an integer-division path if H*W ever exceeds 2**23.
    q = jnp.floor(flat.astype(jnp.float32) * jnp.float32(1.0 / W)).astype(jnp.int32)
    r = flat - q * W
    for _ in range(3):
        under = r < 0
        q = jnp.where(under, q - 1, q)
        r = jnp.where(under, r + W, r)
        over = r >= W
        q = jnp.where(over, q + 1, q)
        r = jnp.where(over, r - W, r)

    row = q.astype(jnp.float32)              # varies along H (torch x_dim)
    col = r.astype(jnp.float32)              # varies along W (torch y_dim)
    # Same formula as torch: arange/(dim-1)*2 - 1  (H==1/W==1 -> NaN like torch).
    xx = row / jnp.float32(H - 1) * 2.0 - 1.0
    yy = col / jnp.float32(W - 1) * 2.0 - 1.0

    o_ref[:, C:C + 1, :] = xx[None].astype(o_ref.dtype)
    o_ref[:, C + 1:C + 2, :] = yy[None].astype(o_ref.dtype)
    if with_r:
        rr = jnp.sqrt((xx - 0.5) * (xx - 0.5) + (yy - 0.5) * (yy - 0.5))
        o_ref[:, C + 2:C + 3, :] = rr[None].astype(o_ref.dtype)


def add_coords_forward(x_nchw, *, with_r=False, lb=None):
    """AddCoords forward. x_nchw: (N, C, H, W) -> (N, C+2(+1), H, W)."""
    N, C, H, W = x_nchw.shape
    n_extra = 3 if with_r else 2
    C_out = C + n_extra
    HW = H * W
    assert HW <= (1 << 23), "flat H*W too large for the f32 divmod estimate"
    itemsize = jnp.dtype(x_nchw.dtype).itemsize

    # Generation-aware budgets (v7x: 64 MiB VMEM -> ~8 MiB/step;
    # v5e/v6e: 128 MiB -> ~16 MiB/step).
    vmem_cap = _vmem_capacity_bytes()
    budget = min(max(vmem_cap // 8, 2 << 20), 16 << 20)
    if lb is None:
        lb = _choose_lb(HW, C, C_out, itemsize, budget)
    assert lb == HW or lb % 128 == 0, "lb must be a multiple of 128 or the full H*W"

    num_l = pl.cdiv(HW, lb)

    # VMEM limit: double-buffered (in + out) block on padded sizes + slack,
    # capped by the physical capacity of this generation.
    sub = _sublane_multiple(itemsize)
    tile_bytes = ((_round_up(C, sub) + _round_up(C_out, sub))
                  * _round_up(lb, 128) * itemsize)
    vmem_limit = int(min(max(2 * tile_bytes + (2 << 20), 16 << 20),
                         int(0.75 * vmem_cap)))

    # Put the larger parallel axis first for a balanced 2-TensorCore split on
    # v7x (neutral on single-TC v5e/v6e).
    if num_l >= N:
        grid = (num_l, N)
        imap = lambda l, n: (n, 0, l)
        l_axis = 0
    else:
        grid = (N, num_l)
        imap = lambda n, l: (n, 0, l)
        l_axis = 1

    bytes_accessed = int((C + C_out) * N * HW * itemsize)
    cost = pl.CostEstimate(
        flops=int(10 * N * HW),
        transcendentals=int(N * HW) if with_r else 0,
        bytes_accessed=bytes_accessed,
    )

    x_flat = x_nchw.reshape(N, C, HW)   # trailing-dim merge: free, no copy
    out_flat = pl.pallas_call(
        functools.partial(addcoords_kernel, C=C, H=H, W=W, Lb=lb,
                          with_r=with_r, l_axis=l_axis),
        out_shape=jax.ShapeDtypeStruct((N, C_out, HW), x_nchw.dtype),
        grid=grid,
        in_specs=[pl.BlockSpec((1, C, lb), imap)],
        out_specs=pl.BlockSpec((1, C_out, lb), imap),
        compiler_params=pltpu.CompilerParams(
            dimension_semantics=("parallel", "parallel"),
            vmem_limit_bytes=vmem_limit),
        cost_estimate=cost,
    )(x_flat)
    return out_flat.reshape(N, C_out, H, W)


def add_coords_reference(x, *, with_r=False):
    """Pure-JAX reference mirroring the PyTorch AddCoords forward."""
    N, C, H, W = x.shape
    rows = jnp.arange(H, dtype=jnp.float32) / (H - 1) * 2.0 - 1.0
    cols = jnp.arange(W, dtype=jnp.float32) / (W - 1) * 2.0 - 1.0
    xx = jnp.broadcast_to(rows[:, None], (H, W))          # varies along H
    yy = jnp.broadcast_to(cols[None, :], (H, W))          # varies along W
    xx_b = jnp.broadcast_to(xx[None, None], (N, 1, H, W)).astype(x.dtype)
    yy_b = jnp.broadcast_to(yy[None, None], (N, 1, H, W)).astype(x.dtype)
    parts = [x, xx_b, yy_b]
    if with_r:
        rr = jnp.sqrt((xx_b.astype(jnp.float32) - 0.5) ** 2 +
                      (yy_b.astype(jnp.float32) - 0.5) ** 2).astype(x.dtype)
        parts.append(rr)
    return jnp.concatenate(parts, axis=1)


if __name__ == "__main__":
    key = jax.random.PRNGKey(0)
    k1, k2 = jax.random.split(key)

    # Small module-consistent shape: batch=2, channels=4, spatial 16x16.
    N, C, H, W = 2, 4, 16, 16
    x = jax.random.normal(k1, (N, C, H, W), dtype=jnp.float32)
    ref = add_coords_reference(x)

    # Default config (with_r=False), auto-chosen tile (single flat block).
    out = jax.block_until_ready(add_coords_forward(x))
    assert out.shape == (N, C + 2, H, W)
    assert jnp.allclose(out, ref, atol=1e-6, rtol=1e-6), "mismatch (with_r=False)"

    # Force a multi-block flat grid to exercise global flat indexing.
    out_tiled = jax.block_until_ready(add_coords_forward(x, lb=128))
    assert jnp.allclose(out_tiled, ref, atol=1e-6, rtol=1e-6), "mismatch (tiled HW)"

    # with_r=True path.
    out_r = jax.block_until_ready(add_coords_forward(x, with_r=True))
    ref_r = add_coords_reference(x, with_r=True)
    assert out_r.shape == (N, C + 3, H, W)
    assert jnp.allclose(out_r, ref_r, atol=1e-6, rtol=1e-6), "mismatch (with_r=True)"

    # Non-128-divisible H*W and non-power-of-two W: exercises the partial last
    # block (masked edge) and the division-free divmod.
    x2 = jax.random.normal(k2, (1, 3, 12, 20), dtype=jnp.float32)
    out2 = jax.block_until_ready(add_coords_forward(x2, with_r=True, lb=128))
    ref2 = add_coords_reference(x2, with_r=True)
    assert out2.shape == (1, 6, 12, 20)
    assert jnp.allclose(out2, ref2, atol=1e-6, rtol=1e-6), "mismatch (partial block)"

    print("KERNEL_OK")
</pallas_src>

<mosaic_0001>
module attributes {stable_mosaic.version = 11 : i64} {
  func.func @addcoords_kernel(%arg0: i32, %arg1: i32, %arg2: memref<1x4x256xf32, #tpu.memory_space<vmem>>, %arg3: memref<1x6x256xf32, #tpu.memory_space<vmem>>) attributes {dimension_semantics = [#tpu.dimension_semantics<parallel>, #tpu.dimension_semantics<parallel>], iteration_bounds = array<i64: 2, 1>, scalar_prefetch = 0 : i64, scratch_operands = 0 : i64, tpu.core_type = #tpu.core_type<tc>, window_params = [{transform_indices = @transform_0, window_bounds = array<i64: 1, 4, 256>}, {transform_indices = @transform_1, window_bounds = array<i64: 1, 6, 256>}]} {
    %c0 = arith.constant 0 : index
    %c0_0 = arith.constant 0 : index
    %c0_1 = arith.constant 0 : index
    %0 = vector.load %arg2[%c0, %c0_0, %c0_1] : memref<1x4x256xf32, #tpu.memory_space<vmem>>, vector<1x4x256xf32>
    %c0_2 = arith.constant 0 : index
    %c0_3 = arith.constant 0 : index
    %c0_4 = arith.constant 0 : index
    %1 = vector.load %arg3[%c0_2, %c0_3, %c0_4] : memref<1x6x256xf32, #tpu.memory_space<vmem>>, vector<1x4x256xf32>
    tpu.vector_store %arg3[%c0_2, %c0_3, %c0_4], %0 {strides = array<i32>} : memref<1x6x256xf32, #tpu.memory_space<vmem>>, vector<1x4x256xf32>,
    %c256_i32 = arith.constant 256 : i32
    %2 = arith.muli %arg1, %c256_i32 : i32
    %3 = tpu.iota {dimensions = array<i32: 1>} : vector<1x256xi32>
    %4 = vector.broadcast %2 : i32 to vector<1x256xi32>
    %5 = arith.addi %3, %4 : vector<1x256xi32>
    %6 = arith.sitofp %5 : vector<1x256xi32> to vector<1x256xf32>
    %cst = arith.constant 6.250000e-02 : f32
    %7 = vector.broadcast %cst : f32 to vector<1x256xf32>
    %8 = arith.mulf %6, %7 : vector<1x256xf32>
    %9 = math.floor %8 : vector<1x256xf32>
    %10 = arith.fptosi %9 : vector<1x256xf32> to vector<1x256xi32>
    %c16_i32 = arith.constant 16 : i32
    %11 = vector.broadcast %c16_i32 : i32 to vector<1x256xi32>
    %12 = arith.muli %10, %11 : vector<1x256xi32>
    %13 = arith.subi %5, %12 : vector<1x256xi32>
    %c0_i32 = arith.constant 0 : i32
    %14 = vector.broadcast %c0_i32 : i32 to vector<1x256xi32>
    %15 = arith.cmpi slt, %13, %14 : vector<1x256xi32>
    %c1_i32 = arith.constant 1 : i32
    %16 = vector.broadcast %c1_i32 : i32 to vector<1x256xi32>
    %17 = arith.subi %10, %16 : vector<1x256xi32>
    %18 = arith.select %15, %17, %10 : vector<1x256xi1>, vector<1x256xi32>
    %c16_i32_5 = arith.constant 16 : i32
    %19 = vector.broadcast %c16_i32_5 : i32 to vector<1x256xi32>
    %20 = arith.addi %13, %19 : vector<1x256xi32>
    %21 = arith.select %15, %20, %13 : vector<1x256xi1>, vector<1x256xi32>
    %c16_i32_6 = arith.constant 16 : i32
    %22 = vector.broadcast %c16_i32_6 : i32 to vector<1x256xi32>
    %23 = arith.cmpi sge, %21, %22 : vector<1x256xi32>
    %c1_i32_7 = arith.constant 1 : i32
    %24 = vector.broadcast %c1_i32_7 : i32 to vector<1x256xi32>
    %25 = arith.addi %18, %24 : vector<1x256xi32>
    %26 = arith.select %23, %25, %18 : vector<1x256xi1>, vector<1x256xi32>
    %c16_i32_8 = arith.constant 16 : i32
    %27 = vector.broadcast %c16_i32_8 : i32 to vector<1x256xi32>
    %28 = arith.subi %21, %27 : vector<1x256xi32>
    %29 = arith.select %23, %28, %21 : vector<1x256xi1>, vector<1x256xi32>
    %c0_i32_9 = arith.constant 0 : i32
    %30 = vector.broadcast %c0_i32_9 : i32 to vector<1x256xi32>
    %31 = arith.cmpi slt, %29, %30 : vector<1x256xi32>
    %c1_i32_10 = arith.constant 1 : i32
    %32 = vector.broadcast %c1_i32_10 : i32 to vector<1x256xi32>
    %33 = arith.subi %26, %32 : vector<1x256xi32>
    %34 = arith.select %31, %33, %26 : vector<1x256xi1>, vector<1x256xi32>
    %c16_i32_11 = arith.constant 16 : i32
    %35 = vector.broadcast %c16_i32_11 : i32 to vector<1x256xi32>
    %36 = arith.addi %29, %35 : vector<1x256xi32>
    %37 = arith.select %31, %36, %29 : vector<1x256xi1>, vector<1x256xi32>
    %c16_i32_12 = arith.constant 16 : i32
    %38 = vector.broadcast %c16_i32_12 : i32 to vector<1x256xi32>
    %39 = arith.cmpi sge, %37, %38 : vector<1x256xi32>
    %c1_i32_13 = arith.constant 1 : i32
    %40 = vector.broadcast %c1_i32_13 : i32 to vector<1x256xi32>
    %41 = arith.addi %34, %40 : vector<1x256xi32>
    %42 = arith.select %39, %41, %34 : vector<1x256xi1>, vector<1x256xi32>
    %c16_i32_14 = arith.constant 16 : i32
    %43 = vector.broadcast %c16_i32_14 : i32 to vector<1x256xi32>
    %44 = arith.subi %37, %43 : vector<1x256xi32>
    %45 = arith.select %39, %44, %37 : vector<1x256xi1>, vector<1x256xi32>
    %c0_i32_15 = arith.constant 0 : i32
    %46 = vector.broadcast %c0_i32_15 : i32 to vector<1x256xi32>
    %47 = arith.cmpi slt, %45, %46 : vector<1x256xi32>
    %c1_i32_16 = arith.constant 1 : i32
    %48 = vector.broadcast %c1_i32_16 : i32 to vector<1x256xi32>
    %49 = arith.subi %42, %48 : vector<1x256xi32>
    %50 = arith.select %47, %49, %42 : vector<1x256xi1>, vector<1x256xi32>
    %c16_i32_17 = arith.constant 16 : i32
    %51 = vector.broadcast %c16_i32_17 : i32 to vector<1x256xi32>
    %52 = arith.addi %45, %51 : vector<1x256xi32>
    %53 = arith.select %47, %52, %45 : vector<1x256xi1>, vector<1x256xi32>
    %c16_i32_18 = arith.constant 16 : i32
    %54 = vector.broadcast %c16_i32_18 : i32 to vector<1x256xi32>
    %55 = arith.cmpi sge, %53, %54 : vector<1x256xi32>
    %c1_i32_19 = arith.constant 1 : i32
    %56 = vector.broadcast %c1_i32_19 : i32 to vector<1x256xi32>
    %57 = arith.addi %50, %56 : vector<1x256xi32>
    %58 = arith.select %55, %57, %50 : vector<1x256xi1>, vector<1x256xi32>
    %c16_i32_20 = arith.constant 16 : i32
    %59 = vector.broadcast %c16_i32_20 : i32 to vector<1x256xi32>
    %60 = arith.subi %53, %59 : vector<1x256xi32>
    %61 = arith.select %55, %60, %53 : vector<1x256xi1>, vector<1x256xi32>
    %62 = arith.sitofp %58 : vector<1x256xi32> to vector<1x256xf32>
    %63 = arith.sitofp %61 : vector<1x256xi32> to vector<1x256xf32>
    %cst_21 = arith.constant 1.500000e+01 : f32
    %64 = vector.broadcast %cst_21 : f32 to vector<1x256xf32>
    %65 = arith.divf %62, %64 : vector<1x256xf32>
    %cst_22 = arith.constant 2.000000e+00 : f32
    %66 = vector.broadcast %cst_22 : f32 to vector<1x256xf32>
    %67 = arith.mulf %65, %66 : vector<1x256xf32>
    %cst_23 = arith.constant 1.000000e+00 : f32
    %68 = vector.broadcast %cst_23 : f32 to vector<1x256xf32>
    %69 = arith.subf %67, %68 : vector<1x256xf32>
    %cst_24 = arith.constant 1.500000e+01 : f32
    %70 = vector.broadcast %cst_24 : f32 to vector<1x256xf32>
    %71 = arith.divf %63, %70 : vector<1x256xf32>
    %cst_25 = arith.constant 2.000000e+00 : f32
    %72 = vector.broadcast %cst_25 : f32 to vector<1x256xf32>
    %73 = arith.mulf %71, %72 : vector<1x256xf32>
    %cst_26 = arith.constant 1.000000e+00 : f32
    %74 = vector.broadcast %cst_26 : f32 to vector<1x256xf32>
    %75 = arith.subf %73, %74 : vector<1x256xf32>
    %76 = vector.shape_cast %69 : vector<1x256xf32> to vector<1x1x256xf32>
    %c0_27 = arith.constant 0 : index
    %c4 = arith.constant 4 : index
    %c0_28 = arith.constant 0 : index
    %77 = vector.load %arg3[%c0_27, %c4, %c0_28] : memref<1x6x256xf32, #tpu.memory_space<vmem>>, vector<1x1x256xf32>
    tpu.vector_store %arg3[%c0_27, %c4, %c0_28], %76 {strides = array<i32>} : memref<1x6x256xf32, #tpu.memory_space<vmem>>, vector<1x1x256xf32>,
    %78 = vector.shape_cast %75 : vector<1x256xf32> to vector<1x1x256xf32>
    %c0_29 = arith.constant 0 : index
    %c5 = arith.constant 5 : index
    %c0_30 = arith.constant 0 : index
    %79 = vector.load %arg3[%c0_29, %c5, %c0_30] : memref<1x6x256xf32, #tpu.memory_space<vmem>>, vector<1x1x256xf32>
    tpu.vector_store %arg3[%c0_29, %c5, %c0_30], %78 {strides = array<i32>} : memref<1x6x256xf32, #tpu.memory_space<vmem>>, vector<1x1x256xf32>,
    return
  }
  func.func @transform_0(%arg0: i32, %arg1: i32) -> (i32, i32, i32) {
    %c0_i32 = arith.constant 0 : i32
    %c0_i32_0 = arith.constant 0 : i32
    return %arg0, %c0_i32, %arg1 : i32, i32, i32
  }
  func.func @transform_1(%arg0: i32, %arg1: i32) -> (i32, i32, i32) {
    %c0_i32 = arith.constant 0 : i32
    %c0_i32_0 = arith.constant 0 : i32
    return %arg0, %c0_i32, %arg1 : i32, i32, i32
  }
}

</mosaic_0001>

<llo_original>
// kernel: tpu_custom_call.1
$region0: #{tpu_custom_call.1}
  #allocation0 [shape = 'u32[]', space=smem, size = 0x4, offset = 0x4, fixed_abs, tag = 'smem constant byte address 0x4 - core index']
  #allocation1 [shape = 'u32[144,128]{1,0:T(1,128)}', space=vmem, size = 0x12000, scoped, tag = 'internal scratch']
  %s0 = inlined_call_operand.hbm [shape: f32[2,4,256], index: 0, kind: input, shape index: {}]
  %s1 = inlined_call_operand.vmem [shape: f32[2,6,256], index: 1, kind: output, shape index: {}]
  %s2 = sld [smem:[#allocation0]]
  $region41: #{tpu_custom_call.1} parent=0
    _
  %s4 = ssub.s32 1, %s2
  %s5 = scalar_select 0, %s4, %s2
  $region1: #{tpu_custom_call.1} parent=0
    #allocation2 [shape = 'u8[8192]{0}', space=vmem, size = 0x2000, scoped, tag = 'input window, operand 0']
    #allocation3 [shape = 's32[2]{0}', space=sflag, size = 0x8, scoped, tag = 'scoped memory for tpu_custom_call.1']
    %6 = vsyncpa [#allocation3], 0
    %s7 = scalar_lea.sflag [#allocation3], 1
    %8 = vsyncpa %s7, 0
    loop: start=0, step=1, limit=4
    $region2: #{tpu_custom_call.1} parent=1 // loop_pre_header
      _
    $region3: #{tpu_custom_call.1} parent=1 // loop_header
      %s10 = sphi 0, %s14
      %p11 = scmp.ge.s32.totalorder %s10, 4
      %s17 = sphi 0, %s29
      %s18 = sphi 0, %s25
      %s19 = sphi 0, %s17
      %s20 = sphi 0, %s18
      %s21 = sphi 0, %s19
      %s22 = sphi 0, %s20
      %s34 = sphi 0, %s36
      %s37 = sphi 0, %s34
      %s38 = sphi 0, %s37
      %s54 = sphi 0, %s38
      %s62 = sphi 0, %s64
      %s65 = sphi 0, %s62
      %s66 = sphi 0, %s65
      %s82 = sphi 0, %s66
    $region4: #{tpu_custom_call.1} parent=1 // loop_header_branch
      %13 = sbr.rel (%p11) target = $region8
    $region5: #{tpu_custom_call.1} parent=1 // loop_body
      %s15 = ssub.s32 %s10, 1
      %s16 = ssub.s32 %s10, 2
      %s23 = sadd.s32 1, %s18
      %p24 = scmp.ge.s32.totalorder %s23, 1
      %s25 = scalar_select %p24, 0, %s23
      %s26 = sadd.s32 1, %s17
      %s27 = scalar_select %p24, %s26, %s17
      %p28 = scmp.ge.s32.totalorder %s27, 2
      %s29 = scalar_select %p28, 0, %s27
      %s30 = ssub.s32 %s17, %s29
      %s31 = ssub.s32 %s18, %s25
      %s32 = sor.u32 %s30, %s31
      %p33 = scmp.eq.s32.totalorder %s32, 0
      %s35 = sadd.s32 %s34, 1
      %s36 = scalar_select %p33, %s34, %s35
      %p39 = pneg %p33
      %p40 = scmp.eq.s32.totalorder %s10, 1
      %p41 = por %p39, %p40
      %p42 = scmp.ne.s32.totalorder %s34, %s37
      %p43 = scmp.eq.s32.totalorder %s10, 0
      %p44 = por %p42, %p43
      %p45 = scmp.ne.s32.totalorder %s34, %s37
      %p46 = scmp.eq.s32.totalorder %s15, 1
      %p47 = por %p45, %p46
      %p48 = scmp.ne.s32.totalorder %s37, %s38
      %p49 = scmp.eq.s32.totalorder %s15, 0
      %p50 = por %p48, %p49
      %p51 = scmp.ne.s32.totalorder %s37, %s38
      %p52 = scmp.eq.s32.totalorder %s16, 1
      %p53 = por %p51, %p52
      %p55 = scmp.ne.s32.totalorder %s38, %s54
      %p56 = scmp.eq.s32.totalorder %s16, 0
      %p57 = por %p55, %p56
      %s58 = ssub.s32 %s17, %s29
      %s59 = ssub.s32 %s18, %s25
      %s60 = sor.u32 %s58, %s59
      %p61 = scmp.eq.s32.totalorder %s60, 0
      %s63 = sadd.s32 %s62, 1
      %s64 = scalar_select %p61, %s62, %s63
      %p67 = pneg %p61
      %p68 = scmp.eq.s32.totalorder %s10, 1
      %p69 = por %p67, %p68
      %p70 = scmp.ne.s32.totalorder %s62, %s65
      %p71 = scmp.eq.s32.totalorder %s10, 0
      %p72 = por %p70, %p71
      %p73 = scmp.ne.s32.totalorder %s62, %s65
      %p74 = scmp.eq.s32.totalorder %s15, 1
      %p75 = por %p73, %p74
      %p76 = scmp.ne.s32.totalorder %s65, %s66
      %p77 = scmp.eq.s32.totalorder %s15, 0
      %p78 = por %p76, %p77
      %p79 = scmp.ne.s32.totalorder %s65, %s66
      %p80 = scmp.eq.s32.totalorder %s16, 1
      %p81 = por %p79, %p80
      %p83 = scmp.ne.s32.totalorder %s66, %s82
      %p84 = scmp.eq.s32.totalorder %s16, 0
      %p85 = por %p83, %p84
      %p86 = scmp.le.s32.totalorder 1, %s10
      %p87 = scmp.lt.s32.totalorder %s10, 3
      %p88 = pnand %p86, %p87
      %p89 = pneg %p88
      // Predicated region
      $region9: #{tpu_custom_call.1} parent=5 // pred_check
        _
      $region10: #{tpu_custom_call.1} parent=5 // pred_check_branch
        %91 = sbr.rel (%p88) target = $region12
      $region11: #{tpu_custom_call.1} parent=5 // pred_region
        %s92 = ssub.s32 %s10, 1
      $region12: #{tpu_custom_call.1} parent=5 // pred_fallthru
        _
      %p93 = scmp.lt.s32.totalorder %s10, 2
      // Predicated region
      $region13: #{tpu_custom_call.1} parent=5 // pred_check
        %p94 = pneg %p93
      $region14: #{tpu_custom_call.1} parent=5 // pred_check_branch
        %96 = sbr.rel (%p94) target = $region16
      $region15: #{tpu_custom_call.1} parent=5 // pred_region
        // Predicated region
        $region17: #{tpu_custom_call.1} parent=15 // pred_check
          %p97 = pneg %p44
        $region18: #{tpu_custom_call.1} parent=15 // pred_check_branch
          %99 = sbr.rel (%p97) target = $region20
        $region19: #{tpu_custom_call.1} parent=15 // pred_region
          %s100 = sand.u32 %s34, 1
          %s101 = scalar_lea.sflag [#allocation3], %s100
          %s102 = sand.u32 %s34, 1
          %s103 = smul.addr %s102, 8
          %s104 = scalar_lea.vmem [#allocation2], %s103
          %s105 = smul.u32 2, %s18
          %s107 = ssub.s32 128, 128
          %108 = vsyncadd %s101, %s107
          %s109 = smul.addr %s17, 2
          %s110 = sadd.s32 %s105, %s109
          %s111 = smul.addr %s110, 64
          %s112 = scalar_lea.hbm %s0, %s111
          %s114 = sshll.u32 %s104, 4
          %s115 = int_to_ptr.vmem [resolvable:$true] %s114
          %117 = dma.hbm_to_vmem [thread:$0]  %s112, 128, %s115, %s101
        $region20: #{tpu_custom_call.1} parent=15 // pred_fallthru
          _
      $region16: #{tpu_custom_call.1} parent=5 // pred_fallthru
        _
      %p118 = scmp.le.s32.totalorder 1, %s10
      %p119 = scmp.lt.s32.totalorder %s10, 3
      %p120 = pnand %p118, %p119
      %p121 = pneg %p120
      // Predicated region
      $region21: #{tpu_custom_call.1} parent=5 // pred_check
        _
      $region22: #{tpu_custom_call.1} parent=5 // pred_check_branch
        %123 = sbr.rel (%p120) target = $region24
      $region23: #{tpu_custom_call.1} parent=5 // pred_region
        %s124 = ssub.s32 %s10, 1
        %s125 = sand.u32 %s37, 1
        %s126 = scalar_lea.sflag [#allocation3], %s125
        %s127 = sand.u32 %s37, 1
        %s128 = smul.addr %s127, 8
        %s129 = scalar_lea.vmem [#allocation2], %s128
        // Predicated region
        $region25: #{tpu_custom_call.1} parent=23 // pred_check
          %p130 = pneg %p50
        $region26: #{tpu_custom_call.1} parent=23 // pred_check_branch
          %132 = sbr.rel (%p130) target = $region28
        $region27: #{tpu_custom_call.1} parent=23 // pred_region
          %133 = dma.done %s126, 128
        $region28: #{tpu_custom_call.1} parent=23 // pred_fallthru
          _
        %s134 = sand.u32 %s37, 1
        %s135 = scalar_lea.sflag [#allocation3], %s134
        %s136 = sand.u32 %s37, 1
        %s137 = smul.addr %s136, 8
        %s138 = scalar_lea.vmem [#allocation2], %s137
        %p139 = pneg %p50
        %p140 = pneg %p47
        %p141 = pneg %p78
        %p142 = pneg %p75
        %s143 = smul.u32 2, %s20
        %p144 = scmp.lt.s32.totalorder %s19, 1
        %s145 = scalar_select %p144, %s19, 1
        %p146 = scmp.lt.s32.totalorder %s143, 1
        %s147 = scalar_select %p146, %s143, 1
        %s148 = smul.addr %s145, 2
        %s149 = sadd.s32 %s147, %s148
        %s150 = smul.addr %s149, 8
        %s151 = scalar_lea.vmem %s1, %s150
        %s152 = smul.u32 2, %s20
        %s153 = smul.u32 2, %s20
        %p154 = scmp.lt.s32.totalorder %s19, 1
        %s155 = scalar_select %p154, %s19, 1
        %p156 = scmp.lt.s32.totalorder %s153, 1
        %s157 = scalar_select %p156, %s153, 1
        %s158 = smul.addr %s155, 2
        %s159 = sadd.s32 %s157, %s158
        %s160 = smul.addr %s159, 8
        %s161 = scalar_lea.vmem %s1, %s160
        %s162 = smul.u32 2, %s20
        %v163 = vld [vmem:[%s129] sm:$0xff]
        %v165 = vcombine.high %v163, %v163
        %167 = vst [vmem:[%s161] sm:$0xf] %v163
        %168 = vst [vmem:[%s161 + $0x8] sm:$0xf] %v165
        %s169 = smul.u32 %s20, 256
        %v170 = vlaneseq
        %v171 = vand.u32 %v170, 127
        %v172 = vadd.s32 %v171, 128
        %v173 = vstv %s169
        %v174 = vadd.s32 %v171, %v173
        %v175 = vadd.s32 %v172, %v173
        %v176 = vcvt.s32.f32 %v174
        %v177 = vcvt.s32.f32 %v175
        %v178 = vmul.f32 %v176, 0.0625
        %v179 = vmul.f32 %v177, 0.0625
        %v180 = vfloor.f32 %v178
        %v181 = vfloor.f32 %v179
        %v182 = vcvt.f32.s32.to.zero.pseudo %v180
        %v183 = vcvt.f32.s32.to.zero.pseudo %v181
        %v184 = vmul.u32 %v182, 16
        %v185 = vmul.u32 %v183, 16
        %v186 = vsub.s32 %v174, %v184
        %v187 = vsub.s32 %v175, %v185
        %vm188 = vcmp.lt.s32.totalorder %v186, 0
        %vm189 = vcmp.lt.s32.totalorder %v187, 0
        %v190 = vsub.s32 %v182, 1
        %v191 = vsub.s32 %v183, 1
        %v192 = vsel %vm188, %v190, %v182
        %v193 = vsel %vm189, %v191, %v183
        %v194 = vadd.s32 %v186, 16
        %v195 = vadd.s32 %v187, 16
        %v196 = vsel %vm188, %v194, %v186
        %v197 = vsel %vm189, %v195, %v187
        %vm198 = vcmp.ge.s32.totalorder %v196, 16
        %vm199 = vcmp.ge.s32.totalorder %v197, 16
        %v200 = vadd.s32 %v192, 1
        %v201 = vadd.s32 %v193, 1
        %v202 = vsel %vm198, %v200, %v192
        %v203 = vsel %vm199, %v201, %v193
        %v204 = vsub.s32 %v196, 16
        %v205 = vsub.s32 %v197, 16
        %v206 = vsel %vm198, %v204, %v196
        %v207 = vsel %vm199, %v205, %v197
        %vm208 = vcmp.lt.s32.totalorder %v206, 0
        %vm209 = vcmp.lt.s32.totalorder %v207, 0
        %v210 = vsub.s32 %v202, 1
        %v211 = vsub.s32 %v203, 1
        %v212 = vsel %vm208, %v210, %v202
        %v213 = vsel %vm209, %v211, %v203
        %v214 = vadd.s32 %v206, 16
        %v215 = vadd.s32 %v207, 16
        %v216 = vsel %vm208, %v214, %v206
        %v217 = vsel %vm209, %v215, %v207
        %vm218 = vcmp.ge.s32.totalorder %v216, 16
        %vm219 = vcmp.ge.s32.totalorder %v217, 16
        %v220 = vadd.s32 %v212, 1
        %v221 = vadd.s32 %v213, 1
        %v222 = vsel %vm218, %v220, %v212
        %v223 = vsel %vm219, %v221, %v213
        %v224 = vsub.s32 %v216, 16
        %v225 = vsub.s32 %v217, 16
        %v226 = vsel %vm218, %v224, %v216
        %v227 = vsel %vm219, %v225, %v217
        %vm228 = vcmp.lt.s32.totalorder %v226, 0
        %vm229 = vcmp.lt.s32.totalorder %v227, 0
        %v230 = vsub.s32 %v222, 1
        %v231 = vsub.s32 %v223, 1
        %v232 = vsel %vm228, %v230, %v222
        %v233 = vsel %vm229, %v231, %v223
        %v234 = vadd.s32 %v226, 16
        %v235 = vadd.s32 %v227, 16
        %v236 = vsel %vm228, %v234, %v226
        %v237 = vsel %vm229, %v235, %v227
        %vm238 = vcmp.ge.s32.totalorder %v236, 16
        %vm239 = vcmp.ge.s32.totalorder %v237, 16
        %v240 = vadd.s32 %v232, 1
        %v241 = vadd.s32 %v233, 1
        %v242 = vsel %vm238, %v240, %v232
        %v243 = vsel %vm239, %v241, %v233
        %v244 = vsub.s32 %v236, 16
        %v245 = vsub.s32 %v237, 16
        %v246 = vsel %vm238, %v244, %v236
        %v247 = vsel %vm239, %v245, %v237
        %v248 = vcvt.s32.f32 %v242
        %v249 = vcvt.s32.f32 %v243
        %v250 = vcvt.s32.f32 %v246
        %v251 = vcvt.s32.f32 %v247
        %v252 = vrcp.pop 15.0
        %v253 = vmul.f32 %v248, %v252
        %v254 = vmul.f32 %v249, %v252
        %v255 = vmul.f32 %v253, 2.0
        %v256 = vmul.f32 %v254, 2.0
        %v257 = vsub.f32 %v255, 1.0
        %v258 = vsub.f32 %v256, 1.0
        %v259 = vmul.f32 %v250, %v252
        %v260 = vmul.f32 %v251, %v252
        %v261 = vmul.f32 %v259, 2.0
        %v262 = vmul.f32 %v260, 2.0
        %v263 = vsub.f32 %v261, 1.0
        %v264 = vsub.f32 %v262, 1.0
        %v267 = vcombine.low %v257, %v258
        %v269 = vunpack.c.l.s4 1966171168
        %v270 = vunpack.c.0.s8 %v269
        %v271 = vlaneseq
        %v272 = vshrl.u32 %v271, 7
        %v273 = vsub.s32 %v270, %v272
        %v274 = vrot.slane %v267, %v273
        %v276 = vunpack.c.l.s4 1966171168
        %v277 = vunpack.c.0.s8 %v276
        %v278 = vlaneseq
        %v279 = vshrl.u32 %v278, 7
        %v280 = vsub.s32 %v277, %v279
        %v281 = vrot.slane %v274, %v280
        %v283 = vlaneseq
        %vm284 = vcmp.ge.s32.totalorder %v283, 0
        %vm285 = vcmp.lt.s32.totalorder %v283, 256
        %vm286 = vmand %vm284, %vm285
        %s287 = scalar_lea.vmem %s161, 4
        %288 = vst.msk [vmem:[%s287] ss:$8 sm:$0x3] %vm286, %v281
        %289 = vst.msk [vmem:[%s287] ss:$8 sm:$0x0] %vm286, %v281
        %v292 = vcombine.low %v263, %v264
        %v294 = vunpack.c.l.s4 1966171168
        %v295 = vunpack.c.0.s8 %v294
        %v296 = vlaneseq
        %v297 = vshrl.u32 %v296, 7
        %v298 = vsub.s32 %v295, %v297
        %v299 = vrot.slane %v292, %v298
        %v301 = vunpack.c.l.s4 1966171168
        %v302 = vunpack.c.0.s8 %v301
        %v303 = vlaneseq
        %v304 = vshrl.u32 %v303, 7
        %v305 = vsub.s32 %v302, %v304
        %v306 = vrot.slane %v299, %v305
        %s308 = scalar_lea.vmem %s161, 5
        %309 = vst.msk [vmem:[%s308] ss:$8 sm:$0x3] %vm286, %v306
        %310 = vst.msk [vmem:[%s308] ss:$8 sm:$0x0] %vm286, %v306
        %s311 = smul.u32 2, %s20
        %p312 = scmp.lt.s32.totalorder %s19, 1
        %s313 = scalar_select %p312, %s19, 1
        %p314 = scmp.lt.s32.totalorder %s311, 1
        %s315 = scalar_select %p314, %s311, 1
        %s316 = smul.addr %s313, 2
        %s317 = sadd.s32 %s315, %s316
        %s318 = smul.addr %s317, 8
        %s319 = scalar_lea.vmem %s1, %s318
        // Predicated region
        $region29: #{tpu_custom_call.1} parent=23 // pred_check
          %p320 = pneg %p75
        $region30: #{tpu_custom_call.1} parent=23 // pred_check_branch
          %322 = sbr.rel (%p320) target = $region32
        $region31: #{tpu_custom_call.1} parent=23 // pred_region
          %s323 = smul.u32 2, %s20
        $region32: #{tpu_custom_call.1} parent=23 // pred_fallthru
          _
      $region24: #{tpu_custom_call.1} parent=5 // pred_fallthru
        _
      %p324 = scmp.le.s32.totalorder 2, %s10
      // Predicated region
      $region33: #{tpu_custom_call.1} parent=5 // pred_check
        %p325 = pneg %p324
      $region34: #{tpu_custom_call.1} parent=5 // pred_check_branch
        %327 = sbr.rel (%p325) target = $region36
      $region35: #{tpu_custom_call.1} parent=5 // pred_region
        %s328 = ssub.s32 %s10, 2
        // Predicated region
        $region37: #{tpu_custom_call.1} parent=35 // pred_check
          %p329 = pneg %p81
        $region38: #{tpu_custom_call.1} parent=35 // pred_check_branch
          %331 = sbr.rel (%p329) target = $region40
        $region39: #{tpu_custom_call.1} parent=35 // pred_region
          %s332 = smul.u32 2, %s22
          %p333 = scmp.lt.s32.totalorder %s21, 1
          %s334 = scalar_select %p333, %s21, 1
          %p335 = scmp.lt.s32.totalorder %s332, 1
          %s336 = scalar_select %p335, %s332, 1
          %s337 = smul.addr %s334, 2
          %s338 = sadd.s32 %s336, %s337
          %s339 = smul.addr %s338, 8
          %s340 = scalar_lea.vmem %s1, %s339
        $region40: #{tpu_custom_call.1} parent=35 // pred_fallthru
          _
      $region36: #{tpu_custom_call.1} parent=5 // pred_fallthru
        _
    $region6: #{tpu_custom_call.1} parent=1 // loop_footer
      %s14 = sadd.s32 1, %s10
    $region7: #{tpu_custom_call.1} parent=1 // loop_footer_branch
      %9 = sbr.rel target = $region3
    $region8: #{tpu_custom_call.1} parent=1 // loop_exit
      _
    %341 = vsyncpa [#allocation3], 1
    %s342 = scalar_lea.sflag [#allocation3], 1
    %343 = vsyncpa %s342, 1

</llo_original>
